<compile_context>
chip_gen: v7x
topology: tpu7x:2x2x1
jax: 0.10.0
libtpu: 0.0.40
codegen_flags: <defaults>
</compile_context>

<pallas_src>
import functools

import jax
import jax.numpy as jnp
from jax.experimental import pallas as pl
from jax.experimental.pallas import tpu as pltpu


def _round_up(x, m):
    return ((x + m - 1) // m) * m


def _absa_head_kernel(h_ref, wf_ref, bf_ref, w2_ref, b2_ref,
                      pooled_ref, task_ref, contr_ref,
                      acc_ref, *, seq_len, tile_s, n_pad, mask_seq):
    s = pl.program_id(1)

    # --- init accumulator on first sequence tile -------------------------------
    @pl.when(s == 0)
    def _init():
        acc_ref[...] = jnp.zeros_like(acc_ref)

    # --- streaming sum over the sequence (reduction) axis ----------------------
    h = h_ref[...].astype(jnp.float32)               # (tile_B, tile_S, D)
    if mask_seq:
        # Last S-tile may overhang the true sequence length: mask padded rows.
        row = jax.lax.broadcasted_iota(jnp.int32, (tile_s, h.shape[-1]), 0) + s * tile_s
        h = h * (row < seq_len).astype(jnp.float32)[None]
    acc_ref[...] += jnp.sum(h, axis=1)               # (tile_B, D)

    # --- finalize on last sequence tile: mean + fused head matmuls -------------
    @pl.when(s == pl.num_programs(1) - 1)
    def _finalize():
        pooled = acc_ref[...] * (1.0 / seq_len)      # divide by true S, once
        pooled_ref[...] = pooled.astype(pooled_ref.dtype)

        # One lane-dense MXU matmul for [task_classifier | contrastive Linear1].
        fused = (jnp.dot(pooled, wf_ref[...], preferred_element_type=jnp.float32)
                 + bf_ref[...])                      # (tile_B, n_pad + proj_hidden)

        task_ref[...] = fused[:, :n_pad].astype(task_ref.dtype)

        mid = jnp.maximum(fused[:, n_pad:], 0.0)     # ReLU
        contr_ref[...] = (jnp.dot(mid, w2_ref[...], preferred_element_type=jnp.float32)
                          + b2_ref[...]).astype(contr_ref.dtype)


def absa_head(encoder_hidden_states, wt, bt, w1, b1, w2, b2,
              *, tile_bytes=4 * 1024 * 1024):
    """Pallas wrapper computing (pooled, task_logits, contrastive_repr).

    Weights are stored pre-transposed as (in_features, out_features), biases as (1, out).
    """
    B, S, D = encoder_hidden_states.shape
    n_tasks = wt.shape[1]
    proj_hidden = w1.shape[1]
    proj_out = w2.shape[1]

    # Pad task columns to a lane-dense multiple of 128 and fuse with w1.
    n_pad = _round_up(max(n_tasks, 1), 128)
    wt_pad = jnp.zeros((D, n_pad), wt.dtype).at[:, :n_tasks].set(wt)
    bt_pad = jnp.zeros((1, n_pad), bt.dtype).at[:, :n_tasks].set(bt.reshape(1, -1))
    w_fused = jnp.concatenate([wt_pad, w1], axis=1)                 # (D, n_pad + 256)
    b_fused = jnp.concatenate([bt_pad, b1.reshape(1, -1)], axis=1)  # (1, n_pad + 256)
    fused_cols = n_pad + proj_hidden

    # Tile sizes: keep each (tile_B, tile_S, D) input buffer within `tile_bytes`
    # so double-buffered prefetch fits comfortably even on v7x's 64 MiB VMEM.
    tile_b = B if B <= 8 else 8
    itemsize = jnp.dtype(encoder_hidden_states.dtype).itemsize
    rows = max(1, tile_bytes // (tile_b * D * itemsize))
    rows = (rows // 8) * 8 if rows >= 8 else 8
    tile_s = max(8, min(_round_up(S, 8), rows))

    nb = pl.cdiv(B, tile_b)
    ns = pl.cdiv(S, tile_s)
    mask_seq = (S % tile_s) != 0

    kernel = functools.partial(_absa_head_kernel, seq_len=S, tile_s=tile_s,
                               n_pad=n_pad, mask_seq=mask_seq)

    out_shapes = (
        jax.ShapeDtypeStruct((B, D), jnp.float32),         # pooled_output
        jax.ShapeDtypeStruct((B, n_pad), jnp.float32),     # task_logits (lane-dense, padded)
        jax.ShapeDtypeStruct((B, proj_out), jnp.float32),  # contrastive_repr
    )

    grid_spec = pltpu.PrefetchScalarGridSpec(
        num_scalar_prefetch=0,
        grid=(nb, ns),
        in_specs=[
            pl.BlockSpec((tile_b, tile_s, D), lambda b, s: (b, s, 0)),   # streamed
            pl.BlockSpec((D, fused_cols), lambda b, s: (0, 0)),          # resident
            pl.BlockSpec((1, fused_cols), lambda b, s: (0, 0)),
            pl.BlockSpec((proj_hidden, proj_out), lambda b, s: (0, 0)),
            pl.BlockSpec((1, proj_out), lambda b, s: (0, 0)),
        ],
        out_specs=[
            pl.BlockSpec((tile_b, D), lambda b, s: (b, 0)),
            pl.BlockSpec((tile_b, n_pad), lambda b, s: (b, 0)),
            pl.BlockSpec((tile_b, proj_out), lambda b, s: (b, 0)),
        ],
        scratch_shapes=[pltpu.VMEM((tile_b, D), jnp.float32)],           # pooled-sum acc
    )

    pooled, task_padded, contr = pl.pallas_call(
        kernel,
        out_shape=out_shapes,
        grid_spec=grid_spec,
        compiler_params=pltpu.CompilerParams(
            dimension_semantics=("parallel", "arbitrary"),
            vmem_limit_bytes=32 * 1024 * 1024,
        ),
    )(encoder_hidden_states, w_fused, b_fused, w2, b2.reshape(1, -1))

    return pooled, task_padded[:, :n_tasks], contr


def reference(encoder_hidden_states, wt, bt, w1, b1, w2, b2):
    pooled = jnp.mean(encoder_hidden_states.astype(jnp.float32), axis=1)
    task_logits = pooled @ wt + bt
    mid = jnp.maximum(pooled @ w1 + b1, 0.0)
    contr = mid @ w2 + b2
    return pooled, task_logits, contr


if __name__ == "__main__":
    # Small shapes consistent with the module's head:
    #   batch=2, seq=8, d_model=128 (synthetic stand-in for t5-base's 768),
    #   n_tasks = len(instruction_templates) = 6, projector 256 -> 128.
    B, S, D = 2, 8, 128
    N_TASKS = 6
    P_HID, P_OUT = 256, 128

    key = jax.random.PRNGKey(0)
    k_h, k_wt, k_bt, k_w1, k_b1, k_w2, k_b2 = jax.random.split(key, 7)

    h = jax.random.normal(k_h, (B, S, D), dtype=jnp.float32)

    # Deterministic parameter init (Linear weights stored as (in, out)).
    wt = jax.random.normal(k_wt, (D, N_TASKS), dtype=jnp.float32) * 0.02
    bt = jax.random.normal(k_bt, (1, N_TASKS), dtype=jnp.float32) * 0.02
    w1 = jax.random.normal(k_w1, (D, P_HID), dtype=jnp.float32) * 0.02
    b1 = jax.random.normal(k_b1, (1, P_HID), dtype=jnp.float32) * 0.02
    w2 = jax.random.normal(k_w2, (P_HID, P_OUT), dtype=jnp.float32) * 0.02
    b2 = jax.random.normal(k_b2, (1, P_OUT), dtype=jnp.float32) * 0.02

    pooled, task_logits, contr = absa_head(h, wt, bt, w1, b1, w2, b2)
    jax.block_until_ready((pooled, task_logits, contr))

    # Correctness check against plain-JAX reference.
    r_pooled, r_task, r_contr = reference(h, wt, bt, w1, b1, w2, b2)
    assert pooled.shape == (B, D) and task_logits.shape == (B, N_TASKS) and contr.shape == (B, P_OUT)
    assert jnp.allclose(pooled, r_pooled, atol=1e-5)
    assert jnp.allclose(task_logits, r_task, atol=1e-5)
    assert jnp.allclose(contr, r_contr, atol=1e-5)

    print("KERNEL_OK")
</pallas_src>

<mosaic_0001>
module attributes {stable_mosaic.version = 11 : i64} {
  func.func @_absa_head_kernel(%arg0: i32, %arg1: i32, %arg2: memref<2x8x128xf32, #tpu.memory_space<vmem>>, %arg3: memref<128x384xf32, #tpu.memory_space<vmem>>, %arg4: memref<1x384xf32, #tpu.memory_space<vmem>>, %arg5: memref<256x128xf32, #tpu.memory_space<vmem>>, %arg6: memref<1x128xf32, #tpu.memory_space<vmem>>, %arg7: memref<2x128xf32, #tpu.memory_space<vmem>>, %arg8: memref<2x128xf32, #tpu.memory_space<vmem>>, %arg9: memref<2x128xf32, #tpu.memory_space<vmem>>, %arg10: memref<2x128xf32, #tpu.memory_space<vmem>>) attributes {dimension_semantics = [#tpu.dimension_semantics<parallel>, #tpu.dimension_semantics<arbitrary>], iteration_bounds = array<i64: 1, 1>, scalar_prefetch = 0 : i64, scratch_operands = 1 : i64, tpu.core_type = #tpu.core_type<tc>, window_params = [{transform_indices = @transform_0, window_bounds = array<i64: 2, 8, 128>}, {pipeline_mode = #tpu.pipeline_mode<synchronous>, transform_indices = @transform_1, window_bounds = array<i64: 128, 384>}, {pipeline_mode = #tpu.pipeline_mode<synchronous>, transform_indices = @transform_2, window_bounds = array<i64: 1, 384>}, {pipeline_mode = #tpu.pipeline_mode<synchronous>, transform_indices = @transform_3, window_bounds = array<i64: 256, 128>}, {pipeline_mode = #tpu.pipeline_mode<synchronous>, transform_indices = @transform_4, window_bounds = array<i64: 1, 128>}, {transform_indices = @transform_5, window_bounds = array<i64: 2, 128>}, {transform_indices = @transform_6, window_bounds = array<i64: 2, 128>}, {transform_indices = @transform_7, window_bounds = array<i64: 2, 128>}]} {
    %c0_i32 = arith.constant 0 : i32
    %0 = arith.cmpi eq, %arg1, %c0_i32 : i32
    %1 = arith.extui %0 : i1 to i32
    %c0_i32_0 = arith.constant 0 : i32
    %2 = arith.cmpi ne, %1, %c0_i32_0 : i32
    scf.if %2 {
      %cst_9 = arith.constant 0.000000e+00 : f32
      %11 = vector.broadcast %cst_9 : f32 to vector<2x128xf32>
      %c0_10 = arith.constant 0 : index
      %c0_11 = arith.constant 0 : index
      %12 = vector.load %arg10[%c0_10, %c0_11] : memref<2x128xf32, #tpu.memory_space<vmem>>, vector<2x128xf32>
      tpu.vector_store %arg10[%c0_10, %c0_11], %11 {strides = array<i32>} : memref<2x128xf32, #tpu.memory_space<vmem>>, vector<2x128xf32>,
    } else {
    }
    %c0 = arith.constant 0 : index
    %c0_1 = arith.constant 0 : index
    %c0_2 = arith.constant 0 : index
    %3 = vector.load %arg2[%c0, %c0_1, %c0_2] : memref<2x8x128xf32, #tpu.memory_space<vmem>>, vector<2x8x128xf32>
    %c0_3 = arith.constant 0 : index
    %c0_4 = arith.constant 0 : index
    %4 = vector.load %arg10[%c0_3, %c0_4] : memref<2x128xf32, #tpu.memory_space<vmem>>, vector<2x128xf32>
    %cst = arith.constant dense<0.000000e+00> : vector<2x128xf32>
    %5 = vector.multi_reduction <add>, %3, %cst [1] : vector<2x8x128xf32> to vector<2x128xf32>
    %6 = arith.addf %4, %5 : vector<2x128xf32>
    %c0_5 = arith.constant 0 : index
    %c0_6 = arith.constant 0 : index
    %7 = vector.load %arg10[%c0_5, %c0_6] : memref<2x128xf32, #tpu.memory_space<vmem>>, vector<2x128xf32>
    tpu.vector_store %arg10[%c0_5, %c0_6], %6 {strides = array<i32>} : memref<2x128xf32, #tpu.memory_space<vmem>>, vector<2x128xf32>,
    %c0_i32_7 = arith.constant 0 : i32
    %8 = arith.cmpi eq, %arg1, %c0_i32_7 : i32
    %9 = arith.extui %8 : i1 to i32
    %c0_i32_8 = arith.constant 0 : i32
    %10 = arith.cmpi ne, %9, %c0_i32_8 : i32
    scf.if %10 {
      %c0_9 = arith.constant 0 : index
      %c0_10 = arith.constant 0 : index
      %11 = vector.load %arg10[%c0_9, %c0_10] : memref<2x128xf32, #tpu.memory_space<vmem>>, vector<2x128xf32>
      %cst_11 = arith.constant 1.250000e-01 : f32
      %12 = vector.broadcast %cst_11 : f32 to vector<2x128xf32>
      %13 = arith.mulf %11, %12 : vector<2x128xf32>
      %c0_12 = arith.constant 0 : index
      %c0_13 = arith.constant 0 : index
      %14 = vector.load %arg7[%c0_12, %c0_13] : memref<2x128xf32, #tpu.memory_space<vmem>>, vector<2x128xf32>
      tpu.vector_store %arg7[%c0_12, %c0_13], %13 {strides = array<i32>} : memref<2x128xf32, #tpu.memory_space<vmem>>, vector<2x128xf32>,
      %c0_14 = arith.constant 0 : index
      %c0_15 = arith.constant 0 : index
      %15 = vector.load %arg3[%c0_14, %c0_15] : memref<128x384xf32, #tpu.memory_space<vmem>>, vector<128x384xf32>
      %cst_16 = arith.constant dense<0.000000e+00> : vector<2x384xf32>
      %16 = tpu.matmul %13, %15, %cst_16 {dimension_numbers = #tpu.dot_dimension_numbers<[1], [0], [0], [1], [0, 0, 1, 1], [], []>} : vector<2x128xf32>, vector<128x384xf32>, vector<2x384xf32> -> vector<2x384xf32>
      %c0_17 = arith.constant 0 : index
      %c0_18 = arith.constant 0 : index
      %17 = vector.load %arg4[%c0_17, %c0_18] : memref<1x384xf32, #tpu.memory_space<vmem>>, vector<1x384xf32>
      %18 = vector.broadcast %17 : vector<1x384xf32> to vector<2x384xf32>
      %19 = arith.addf %16, %18 : vector<2x384xf32>
      %20 = vector.extract_strided_slice %19 {offsets = [0, 0], sizes = [2, 128], strides = [1, 1]} : vector<2x384xf32> to vector<2x128xf32>
      %c0_19 = arith.constant 0 : index
      %c0_20 = arith.constant 0 : index
      %21 = vector.load %arg8[%c0_19, %c0_20] : memref<2x128xf32, #tpu.memory_space<vmem>>, vector<2x128xf32>
      tpu.vector_store %arg8[%c0_19, %c0_20], %20 {strides = array<i32>} : memref<2x128xf32, #tpu.memory_space<vmem>>, vector<2x128xf32>,
      %22 = vector.extract_strided_slice %19 {offsets = [0, 128], sizes = [2, 256], strides = [1, 1]} : vector<2x384xf32> to vector<2x256xf32>
      %cst_21 = arith.constant 0.000000e+00 : f32
      %23 = vector.broadcast %cst_21 : f32 to vector<2x256xf32>
      %24 = arith.maximumf %22, %23 : vector<2x256xf32>
      %c0_22 = arith.constant 0 : index
      %c0_23 = arith.constant 0 : index
      %25 = vector.load %arg5[%c0_22, %c0_23] : memref<256x128xf32, #tpu.memory_space<vmem>>, vector<256x128xf32>
      %cst_24 = arith.constant dense<0.000000e+00> : vector<2x128xf32>
      %26 = tpu.matmul %24, %25, %cst_24 {dimension_numbers = #tpu.dot_dimension_numbers<[1], [0], [0], [1], [0, 0, 1, 1], [], []>} : vector<2x256xf32>, vector<256x128xf32>, vector<2x128xf32> -> vector<2x128xf32>
      %c0_25 = arith.constant 0 : index
      %c0_26 = arith.constant 0 : index
      %27 = vector.load %arg6[%c0_25, %c0_26] : memref<1x128xf32, #tpu.memory_space<vmem>>, vector<1x128xf32>
      %28 = vector.broadcast %27 : vector<1x128xf32> to vector<2x128xf32>
      %29 = arith.addf %26, %28 : vector<2x128xf32>
      %c0_27 = arith.constant 0 : index
      %c0_28 = arith.constant 0 : index
      %30 = vector.load %arg9[%c0_27, %c0_28] : memref<2x128xf32, #tpu.memory_space<vmem>>, vector<2x128xf32>
      tpu.vector_store %arg9[%c0_27, %c0_28], %29 {strides = array<i32>} : memref<2x128xf32, #tpu.memory_space<vmem>>, vector<2x128xf32>,
    } else {
    }
    return
  }
  func.func @transform_0(%arg0: i32, %arg1: i32) -> (i32, i32, i32) {
    %c0_i32 = arith.constant 0 : i32
    %c0_i32_0 = arith.constant 0 : i32
    return %arg0, %arg1, %c0_i32 : i32, i32, i32
  }
  func.func @transform_1(%arg0: i32, %arg1: i32) -> (i32, i32) {
    %c0_i32 = arith.constant 0 : i32
    %c0_i32_0 = arith.constant 0 : i32
    %c0_i32_1 = arith.constant 0 : i32
    return %c0_i32, %c0_i32_0 : i32, i32
  }
  func.func @transform_2(%arg0: i32, %arg1: i32) -> (i32, i32) {
    %c0_i32 = arith.constant 0 : i32
    %c0_i32_0 = arith.constant 0 : i32
    %c0_i32_1 = arith.constant 0 : i32
    return %c0_i32, %c0_i32_0 : i32, i32
  }
  func.func @transform_3(%arg0: i32, %arg1: i32) -> (i32, i32) {
    %c0_i32 = arith.constant 0 : i32
    %c0_i32_0 = arith.constant 0 : i32
    %c0_i32_1 = arith.constant 0 : i32
    return %c0_i32, %c0_i32_0 : i32, i32
  }
  func.func @transform_4(%arg0: i32, %arg1: i32) -> (i32, i32) {
    %c0_i32 = arith.constant 0 : i32
    %c0_i32_0 = arith.constant 0 : i32
    %c0_i32_1 = arith.constant 0 : i32
    return %c0_i32, %c0_i32_0 : i32, i32
  }
  func.func @transform_5(%arg0: i32, %arg1: i32) -> (i32, i32) {
    %c0_i32 = arith.constant 0 : i32
    %c0_i32_0 = arith.constant 0 : i32
    return %arg0, %c0_i32 : i32, i32
  }
  func.func @transform_6(%arg0: i32, %arg1: i32) -> (i32, i32) {
    %c0_i32 = arith.constant 0 : i32
    %c0_i32_0 = arith.constant 0 : i32
    return %arg0, %c0_i32 : i32, i32
  }
  func.func @transform_7(%arg0: i32, %arg1: i32) -> (i32, i32) {
    %c0_i32 = arith.constant 0 : i32
    %c0_i32_0 = arith.constant 0 : i32
    return %arg0, %c0_i32 : i32, i32
  }
}

</mosaic_0001>

<llo_original>
// kernel: tpu_custom_call.1
$region0: #{tpu_custom_call.1}
  #allocation0 [shape = 'u32[]', space=smem, size = 0x4, offset = 0x4, fixed_abs, tag = 'smem constant byte address 0x4 - core index']
  #allocation1 [shape = 'u32[144,128]{1,0:T(1,128)}', space=vmem, size = 0x12000, scoped, tag = 'internal scratch']
  #allocation2 [shape = 'f32[2,128]{1,0:T(2,128)}', space=vmem, size = 0x400, scoped, tag = 'scratch operand']
  %s0 = inlined_call_operand.hbm [shape: f32[2,8,128], index: 0, kind: input, shape index: {}]
  %s1 = inlined_call_operand.hbm [shape: f32[128,384], index: 1, kind: input, shape index: {}]
  %s2 = inlined_call_operand.vmem [shape: f32[1,384], index: 2, kind: input, shape index: {}]
  %s3 = inlined_call_operand.hbm [shape: f32[256,128], index: 3, kind: input, shape index: {}]
  %s4 = inlined_call_operand.vmem [shape: f32[1,128], index: 4, kind: input, shape index: {}]
  %s5 = inlined_call_operand.hbm [shape: f32[2,128], index: 5, kind: output, shape index: {0}]
  %s6 = inlined_call_operand.hbm [shape: f32[2,128], index: 6, kind: output, shape index: {1}]
  %s7 = inlined_call_operand.hbm [shape: f32[2,128], index: 7, kind: output, shape index: {2}]
  %8 = xla_tuple %s5, %s6, %s7
  %s9 = sld [smem:[#allocation0]]
  $region66: #{tpu_custom_call.1} parent=0
    _
  %s11 = ssub.s32 1, %s9
  %s12 = scalar_select 0, %s11, %s9
  $region1: #{tpu_custom_call.1} parent=0
    #allocation3 [shape = 'u8[8192]{0}', space=vmem, size = 0x2000, scoped, tag = 'input window, operand 0, single buffered']
    #allocation4 [shape = 's32[1]{0}', space=sflag, size = 0x4, scoped, tag = 'scoped memory for tpu_custom_call.1']
    #allocation5 [shape = 's32[1]{0}', space=sflag, size = 0x4, scoped, tag = 'scoped memory for tpu_custom_call.1']
    #allocation6 [shape = 'u8[196608]{0}', space=vmem, size = 0x30000, scoped, tag = 'input window, operand 1, single buffered']
    #allocation7 [shape = 's32[1]{0}', space=sflag, size = 0x4, scoped, tag = 'scoped memory for tpu_custom_call.1']
    #allocation8 [shape = 'u8[131072]{0}', space=vmem, size = 0x20000, scoped, tag = 'input window, operand 3, single buffered']
    #allocation9 [shape = 'u8[1024]{0}', space=vmem, size = 0x400, scoped, tag = 'output window, operand 0, single buffered']
    #allocation10 [shape = 'u8[1024]{0}', space=vmem, size = 0x400, scoped, tag = 'output window, operand 1, single buffered']
    #allocation11 [shape = 's32[1]{0}', space=sflag, size = 0x4, scoped, tag = 'scoped memory for tpu_custom_call.1']
    #allocation12 [shape = 'u8[1024]{0}', space=vmem, size = 0x400, scoped, tag = 'output window, operand 2, single buffered']
    %13 = vsyncpa [#allocation4], 0
    %14 = vsyncpa [#allocation7], 0
    %15 = vsyncpa [#allocation5], 0
    %16 = vsyncpa [#allocation11], 0
    // Predicated region
    $region2: #{tpu_custom_call.1} parent=1 // pred_check
      _
    $region3: #{tpu_custom_call.1} parent=1 // pred_check_branch
      %18 = sbr.rel (0) target = $region5
    $region4: #{tpu_custom_call.1} parent=1 // pred_region
      %s20 = ssub.s32 256, 256
      %21 = vsyncadd [#allocation4], %s20
      %s22 = sshll.u32 [#allocation3], 4
      %s23 = int_to_ptr.vmem [resolvable:$true] %s22
      %28 = dma.hbm_to_vmem [thread:$0]  %s0, 256, %s23, [#allocation4], 128, 128, 8
    $region5: #{tpu_custom_call.1} parent=1 // pred_fallthru
      _
    // Predicated region
    $region6: #{tpu_custom_call.1} parent=1 // pred_check
      _
    $region7: #{tpu_custom_call.1} parent=1 // pred_check_branch
      %30 = sbr.rel (0) target = $region9
    $region8: #{tpu_custom_call.1} parent=1 // pred_region
      %s32 = ssub.s32 6144, 6144
      %33 = vsyncadd [#allocation7], %s32
      %s34 = sshll.u32 [#allocation6], 4
      %s35 = int_to_ptr.vmem [resolvable:$true] %s34
      %40 = dma.hbm_to_vmem [thread:$0]  %s1, 6144, %s35, [#allocation7], 384, 384, 24
    $region9: #{tpu_custom_call.1} parent=1 // pred_fallthru
      _
    // Predicated region
    $region10: #{tpu_custom_call.1} parent=1 // pred_check
      _
    $region11: #{tpu_custom_call.1} parent=1 // pred_check_branch
      %42 = sbr.rel (0) target = $region13
    $region12: #{tpu_custom_call.1} parent=1 // pred_region
      _
    $region13: #{tpu_custom_call.1} parent=1 // pred_fallthru
      _
    // Predicated region
    $region14: #{tpu_custom_call.1} parent=1 // pred_check
      _
    $region15: #{tpu_custom_call.1} parent=1 // pred_check_branch
      %44 = sbr.rel (0) target = $region17
    $region16: #{tpu_custom_call.1} parent=1 // pred_region
      %s46 = ssub.s32 4096, 4096
      %47 = vsyncadd [#allocation7], %s46
      %s48 = sshll.u32 [#allocation8], 4
      %s49 = int_to_ptr.vmem [resolvable:$true] %s48
      %54 = dma.hbm_to_vmem [thread:$0]  %s3, 4096, %s49, [#allocation7], 128, 128, 8
    $region17: #{tpu_custom_call.1} parent=1 // pred_fallthru
      _
    // Predicated region
    $region18: #{tpu_custom_call.1} parent=1 // pred_check
      _
    $region19: #{tpu_custom_call.1} parent=1 // pred_check_branch
      %56 = sbr.rel (0) target = $region21
    $region20: #{tpu_custom_call.1} parent=1 // pred_region
      _
    $region21: #{tpu_custom_call.1} parent=1 // pred_fallthru
      _
    // Predicated region
    $region22: #{tpu_custom_call.1} parent=1 // pred_check
      _
    $region23: #{tpu_custom_call.1} parent=1 // pred_check_branch
      %58 = sbr.rel (0) target = $region25
    $region24: #{tpu_custom_call.1} parent=1 // pred_region
      %59 = dma.done [#allocation4], 256
    $region25: #{tpu_custom_call.1} parent=1 // pred_fallthru
      _
    // Predicated region
    $region26: #{tpu_custom_call.1} parent=1 // pred_check
      _
    $region27: #{tpu_custom_call.1} parent=1 // pred_check_branch
      %61 = sbr.rel (0) target = $region29
    $region28: #{tpu_custom_call.1} parent=1 // pred_region
      %62 = dma.done [#allocation7], 6144
    $region29: #{tpu_custom_call.1} parent=1 // pred_fallthru
      _
    // Predicated region
    $region30: #{tpu_custom_call.1} parent=1 // pred_check
      _
    $region31: #{tpu_custom_call.1} parent=1 // pred_check_branch
      %64 = sbr.rel (0) target = $region33
    $region32: #{tpu_custom_call.1} parent=1 // pred_region
      %65 = dma.done [#allocation7], 4096
    $region33: #{tpu_custom_call.1} parent=1 // pred_fallthru
      _
    %p66 = scmp.eq.s32.totalorder 0, 0
    // Predicated region
    $region34: #{tpu_custom_call.1} parent=1 // pred_check
      %p67 = pneg %p66
    $region35: #{tpu_custom_call.1} parent=1 // pred_check_branch
      %69 = sbr.rel (%p67) target = $region37
    $region36: #{tpu_custom_call.1} parent=1 // pred_region
      %70 = vst [vmem:[#allocation2] sm:$0x3] 0.0
    $region37: #{tpu_custom_call.1} parent=1 // pred_fallthru
      _
    %v71 = vld [vmem:[#allocation3] sm:$0xff]
    %v72 = vld [vmem:[#allocation3 + $0x8] sm:$0xff]
    %v73 = vld [vmem:[#allocation2] sm:$0x3]
    %v74 = vrot.slane %v71, 4
    %v75 = vadd.f32 %v71, %v74
    %v76 = vrot.slane %v75, 2
    %v77 = vadd.f32 %v75, %v76
    %v78 = vrot.slane %v77, 1
    %v79 = vadd.f32 %v77, %v78
    %v80 = vrot.slane %v72, 4
    %v81 = vadd.f32 %v72, %v80
    %v82 = vrot.slane %v81, 2
    %v83 = vadd.f32 %v81, %v82
    %v84 = vrot.slane %v83, 1
    %v85 = vadd.f32 %v83, %v84
    %vm88 = vcmask 1041409
    %v89 = vsel %vm88, %v85, %v79
    %v91 = vadd.f32 %v73, %v89
    %92 = vst [vmem:[#allocation2] sm:$0x3] %v91
    // Predicated region
    $region38: #{tpu_custom_call.1} parent=1 // pred_check
      %p93 = pneg %p66
    $region39: #{tpu_custom_call.1} parent=1 // pred_check_branch
      %95 = sbr.rel (%p93) target = $region41
    $region40: #{tpu_custom_call.1} parent=1 // pred_region
      %v96 = vld [vmem:[#allocation2] sm:$0x3]
      %v97 = vmul.f32 %v96, 0.125
      %98 = vst [vmem:[#allocation9] sm:$0x3] %v97
      %v99 = vld [vmem:[#allocation6] sm:$0xff]
      %v100 = vld [vmem:[#allocation6 + $0x8] sm:$0xff]
      %v101 = vld [vmem:[#allocation6 + $0x10] sm:$0xff]
      %v102 = vld [vmem:[#allocation6 + $0x18] sm:$0xff]
      %v103 = vld [vmem:[#allocation6 + $0x20] sm:$0xff]
      %v104 = vld [vmem:[#allocation6 + $0x28] sm:$0xff]
      %v105 = vld [vmem:[#allocation6 + $0x30] sm:$0xff]
      %v106 = vld [vmem:[#allocation6 + $0x38] sm:$0xff]
      %v107 = vld [vmem:[#allocation6 + $0x40] sm:$0xff]
      %v108 = vld [vmem:[#allocation6 + $0x48] sm:$0xff]
      %v109 = vld [vmem:[#allocation6 + $0x50] sm:$0xff]
      %v110 = vld [vmem:[#allocation6 + $0x58] sm:$0xff]
      %v111 = vld [vmem:[#allocation6 + $0x60] sm:$0xff]
      %v112 = vld [vmem:[#allocation6 + $0x68] sm:$0xff]
      %v113 = vld [vmem:[#allocation6 + $0x70] sm:$0xff]
      %v114 = vld [vmem:[#allocation6 + $0x78] sm:$0xff]
      %v115 = vld [vmem:[#allocation6 + $0x80] sm:$0xff]
      %v116 = vld [vmem:[#allocation6 + $0x88] sm:$0xff]
      %v117 = vld [vmem:[#allocation6 + $0x90] sm:$0xff]
      %v118 = vld [vmem:[#allocation6 + $0x98] sm:$0xff]
      %v119 = vld [vmem:[#allocation6 + $0xa0] sm:$0xff]
      %v120 = vld [vmem:[#allocation6 + $0xa8] sm:$0xff]
      %v121 = vld [vmem:[#allocation6 + $0xb0] sm:$0xff]
      %v122 = vld [vmem:[#allocation6 + $0xb8] sm:$0xff]
      %v123 = vld [vmem:[#allocation6 + $0xc0] sm:$0xff]
      %v124 = vld [vmem:[#allocation6 + $0xc8] sm:$0xff]
      %v125 = vld [vmem:[#allocation6 + $0xd0] sm:$0xff]
      %v126 = vld [vmem:[#allocation6 + $0xd8] sm:$0xff]
      %v127 = vld [vmem:[#allocation6 + $0xe0] sm:$0xff]
      %v128 = vld [vmem:[#allocation6 + $0xe8] sm:$0xff]
      %v129 = vld [vmem:[#allocation6 + $0xf0] sm:$0xff]
      %v130 = vld [vmem:[#allocation6 + $0xf8] sm:$0xff]
      %v131 = vld [vmem:[#allocation6 + $0x100] sm:$0xff]
      %v132 = vld [vmem:[#allocation6 + $0x108] sm:$0xff]
      %v133 = vld [vmem:[#allocation6 + $0x110] sm:$0xff]
      %v134 = vld [vmem:[#allocation6 + $0x118] sm:$0xff]
      %v135 = vld [vmem:[#allocation6 + $0x120] sm:$0xff]
      %v136 = vld [vmem:[#allocation6 + $0x128] sm:$0xff]
      %v137 = vld [vmem:[#allocation6 + $0x130] sm:$0xff]
      %v138 = vld [vmem:[#allocation6 + $0x138] sm:$0xff]
      %v139 = vld [vmem:[#allocation6 + $0x140] sm:$0xff]
      %v140 = vld [vmem:[#allocation6 + $0x148] sm:$0xff]
      %v141 = vld [vmem:[#allocation6 + $0x150] sm:$0xff]
      %v142 = vld [vmem:[#allocation6 + $0x158] sm:$0xff]
      %v143 = vld [vmem:[#allocation6 + $0x160] sm:$0xff]
      %v144 = vld [vmem:[#allocation6 + $0x168] sm:$0xff]
      %v145 = vld [vmem:[#allocation6 + $0x170] sm:$0xff]
      %v146 = vld [vmem:[#allocation6 + $0x178] sm:$0xff]
      %v147 = vld [vmem:[%s2] sm:$0x7]
      %v149 = vlaneseq
      %v150 = vshrl.u32 %v149, 7
      %v151 = vsub.s32 0, %v150
      %v152 = vrot.slane %v147, %v151
      %v153 = vlaneseq
      %v154 = vshrl.u32 %v153, 7
      %v155 = vsub.s32 1, %v154
      %v156 = vrot.slane %v147, %v155
      %v157 = vlaneseq
      %v158 = vshrl.u32 %v157, 7
      %v159 = vsub.s32 2, %v158
      %v160 = vrot.slane %v147, %v159
      %164 = vmatprep.subr.mxu0 %v100
      %165 = vmatpush1.msra.mxu0 %v99
      %166 = vmatprep.subr.mxu0 %v103
      %167 = vmatpush1.msra.mxu0 %v102
      %168 = vmatprep.subr.mxu0 %v106
      %169 = vmatpush1.msra.mxu0 %v105
      %170 = vmatprep.subr.mxu0 %v109
      %171 = vmatpush1.msra.mxu0 %v108
      %172 = vmatprep.subr.mxu0 %v112
      %173 = vmatpush1.msra.mxu0 %v111
      %174 = vmatprep.subr.mxu0 %v115
      %175 = vmatpush1.msra.mxu0 %v114
      %176 = vmatprep.subr.mxu0 %v118
      %177 = vmatpush1.msra.mxu0 %v117
      %178 = vmatprep.subr.mxu0 %v121
      %179 = vmatpush1.msra.mxu0 %v120
      %180 = vmatprep.subr.mxu0 %v124
      %181 = vmatpush1.msra.mxu0 %v123
      %182 = vmatprep.subr.mxu0 %v127
      %183 = vmatpush1.msra.mxu0 %v126
      %184 = vmatprep.subr.mxu0 %v130
      %185 = vmatpush1.msra.mxu0 %v129
      %186 = vmatprep.subr.mxu0 %v133
      %187 = vmatpush1.msra.mxu0 %v132
      %188 = vmatprep.subr.mxu0 %v136
      %189 = vmatpush1.msra.mxu0 %v135
      %190 = vmatprep.subr.mxu0 %v139
      %191 = vmatpush1.msra.mxu0 %v138
      %192 = vmatprep.subr.mxu0 %v142
      %193 = vmatpush1.msra.mxu0 %v141
      %194 = vmatprep.subr.mxu0 %v145
      %195 = vmatpush1.msra.mxu0 %v144
      %196 = vmatprep.subr.mxu0 0.0
      %197 = vmatpush1.msra.mxu0 0.0
      %198 = vmatprep.subr.mxu0 0.0
      %199 = vmatpush1.msra.mxu0 0.0
      %200 = vmatprep.subr.mxu0 0.0
      %201 = vmatpush1.msra.mxu0 0.0
      %202 = vmatprep.subr.mxu0 0.0
      %203 = vmatpush1.msra.mxu0 0.0
      %204 = vmatprep.subr.mxu0 0.0
      %205 = vmatpush1.msra.mxu0 0.0
      %206 = vmatprep.subr.mxu0 0.0
      %207 = vmatpush1.msra.mxu0 0.0
      %208 = vmatprep.subr.mxu0 0.0
      %209 = vmatpush1.msra.mxu0 0.0
      %210 = vmatprep.subr.mxu0 0.0
      %211 = vmatpush1.msra.mxu0 0.0
      %212 = vmatprep.subr.mxu0 0.0
      %213 = vmatpush1.msra.mxu0 0.0
      %214 = vmatprep.subr.mxu0 0.0
      %215 = vmatpush1.msra.mxu0 0.0
      %216 = vmatprep.subr.mxu0 0.0
      %217 = vmatpush1.msra.mxu0 0.0
      %218 = vmatprep.subr.mxu0 0.0
      %219 = vmatpush1.msra.mxu0 0.0
      %220 = vmatprep.subr.mxu0 0.0
      %221 = vmatpush1.msra.mxu0 0.0
      %222 = vmatprep.subr.mxu0 0.0
      %223 = vmatpush1.msra.mxu0 0.0
      %224 = vmatprep.subr.mxu0 0.0
      %225 = vmatpush1.msra.mxu0 0.0
      %226 = vmatprep.subr.mxu0 0.0
      %227 = vmatpush1.msra.mxu0 0.0
      %228 = vmatprep.mubr.f32.mxu0 0.0
      %229 = vmatmul.mubr.f32.gmra.mrb[0].mxu0 %v97
      %v230 = vpop.f32.mrb[0].mxu0
      %v231 = vadd.f32 %v152, %v230
      %v232 = vpop.f32.mrb[0].mxu0
      %v233 = vadd.f32 %v156, %v232
      %234 = vdwg.mxu0
      %235 = vmatprep.subr.mxu0 0.0
      %236 = vmatpush1.msra.mxu0 %v101
      %237 = vmatprep.subr.mxu0 0.0
      %238 = vmatpush1.msra.mxu0 %v104
      %239 = vmatprep.subr.mxu0 0.0
      %240 = vmatpush1.msra.mxu0 %v107
      %241 = vmatprep.subr.mxu0 0.0
      %242 = vmatpush1.msra.mxu0 %v110
      %243 = vmatprep.subr.mxu0 0.0
      %244 = vmatpush1.msra.mxu0 %v113
      %245 = vmatprep.subr.mxu0 0.0
      %246 = vmatpush1.msra.mxu0 %v116
      %247 = vmatprep.subr.mxu0 0.0
      %248 = vmatpush1.msra.mxu0 %v119
      %249 = vmatprep.subr.mxu0 0.0
      %250 = vmatpush1.msra.mxu0 %v122
      %251 = vmatprep.subr.mxu0 0.0
      %252 = vmatpush1.msra.mxu0 %v125
      %253 = vmatprep.subr.mxu0 0.0
      %254 = vmatpush1.msra.mxu0 %v128
      %255 = vmatprep.subr.mxu0 0.0
      %256 = vmatpush1.msra.mxu0 %v131
      %257 = vmatprep.subr.mxu0 0.0
      %258 = vmatpush1.msra.mxu0 %v134
      %259 = vmatprep.subr.mxu0 0.0
      %260 = vmatpush1.msra.mxu0 %v137
      %261 = vmatprep.subr.mxu0 0.0
      %262 = vmatpush1.msra.mxu0 %v140
      %263 = vmatprep.subr.mxu0 0.0
      %264 = vmatpush1.msra.mxu0 %v143
      %265 = vmatprep.subr.mxu0 0.0
      %266 = vmatpush1.msra.mxu0 %v146
      %267 = vmatprep.subr.mxu0 0.0
      %268 = vmatpush1.msra.mxu0 0.0
      %269 = vmatprep.subr.mxu0 0.0
      %270 = vmatpush1.msra.mxu0 0.0
      %271 = vmatprep.subr.mxu0 0.0
      %272 = vmatpush1.msra.mxu0 0.0
      %273 = vmatprep.subr.mxu0 0.0
      %274 = vmatpush1.msra.mxu0 0.0
      %275 = vmatprep.subr.mxu0 0.0
      %276 = vmatpush1.msra.mxu0 0.0
      %277 = vmatprep.subr.mxu0 0.0
      %278 = vmatpush1.msra.mxu0 0.0
      %279 = vmatprep.subr.mxu0 0.0
      %280 = vmatpush1.msra.mxu0 0.0
      %281 = vmatprep.subr.mxu0 0.0
      %282 = vmatpush1.msra.mxu0 0.0
      %283 = vmatprep.subr.mxu0 0.0
      %284 = vmatpush1.msra.mxu0 0.0
      %285 = vmatprep.subr.mxu0 0.0
      %286 = vmatpush1.msra.mxu0 0.0
      %287 = vmatprep.subr.mxu0 0.0
      %288 = vmatpush1.msra.mxu0 0.0
      %289 = vmatprep.subr.mxu0 0.0
      %290 = vmatpush1.msra.mxu0 0.0
      %291 = vmatprep.subr.mxu0 0.0
      %292 = vmatpush1.msra.mxu0 0.0
      %293 = vmatprep.subr.mxu0 0.0
      %294 = vmatpush1.msra.mxu0 0.0
      %295 = vmatprep.subr.mxu0 0.0
      %296 = vmatpush1.msra.mxu0 0.0
      %297 = vmatprep.subr.mxu0 0.0
      %298 = vmatpush1.msra.mxu0 0.0
      %299 = vmatprep.mubr.f32.mxu0 0.0
      %300 = vmatmul.mubr.f32.gmra.mrb[0].mxu0 %v97
      %v301 = vpop.f32.mrb[0].mxu0
      %v302 = vadd.f32 %v160, %v301
      %v303 = vpop.f32.mrb[0].mxu0
      %304 = vdwg.mxu0
      %305 = vst [vmem:[#allocation10] sm:$0x3] %v231
      %v306 = vmax.f32 %v233, 0.0
      %v307 = vmax.f32 %v302, 0.0
      %v308 = vld [vmem:[#allocation8] sm:$0xff]
      %v309 = vld [vmem:[#allocation8 + $0x8] sm:$0xff]
      %v310 = vld [vmem:[#allocation8 + $0x10] sm:$0xff]
      %v311 = vld [vmem:[#allocation8 + $0x18] sm:$0xff]
      %v312 = vld [vmem:[#allocation8 + $0x20] sm:$0xff]
      %v313 = vld [vmem:[#allocation8 + $0x28] sm:$0xff]
      %v314 = vld [vmem:[#allocation8 + $0x30] sm:$0xff]
      %v315 = vld [vmem:[#allocation8 + $0x38] sm:$0xff]
      %v316 = vld [vmem:[#allocation8 + $0x40] sm:$0xff]
      %v317 = vld [vmem:[#allocation8 + $0x48] sm:$0xff]
      %v318 = vld [vmem:[#allocation8 + $0x50] sm:$0xff]
      %v319 = vld [vmem:[#allocation8 + $0x58] sm:$0xff]
      %v320 = vld [vmem:[#allocation8 + $0x60] sm:$0xff]
      %v321 = vld [vmem:[#allocation8 + $0x68] sm:$0xff]
      %v322 = vld [vmem:[#allocation8 + $0x70] sm:$0xff]
      %v323 = vld [vmem:[#allocation8 + $0x78] sm:$0xff]
      %v324 = vld [vmem:[#allocation8 + $0x80] sm:$0xff]
      %v325 = vld [vmem:[#allocation8 + $0x88] sm:$0xff]
      %v326 = vld [vmem:[#allocation8 + $0x90] sm:$0xff]
      %v327 = vld [vmem:[#allocation8 + $0x98] sm:$0xff]
      %v328 = vld [vmem:[#allocation8 + $0xa0] sm:$0xff]
      %v329 = vld [vmem:[#allocation8 + $0xa8] sm:$0xff]
      %v330 = vld [vmem:[#allocation8 + $0xb0] sm:$0xff]
      %v331 = vld [vmem:[#allocation8 + $0xb8] sm:$0xff]
      %v332 = vld [vmem:[#allocation8 + $0xc0] sm:$0xff]
      %v333 = vld [vmem:[#allocation8 + $0xc8] sm:$0xff]
      %v334 = vld [vmem:[#allocation8 + $0xd0] sm:$0xff]
      %v335 = vld [vmem:[#allocation8 + $0xd8] sm:$0xff]
      %v336 = vld [vmem:[#allocation8 + $0xe0] sm:$0xff]
      %v337 = vld [vmem:[#allocation8 + $0xe8] sm:$0xff]
      %v338 = vld [vmem:[#allocation8 + $0xf0] sm:$0xff]
      %v339 = vld [vmem:[#allocation8 + $0xf8] sm:$0xff]
      %v340 = vld [vmem:[%s4] sm:$0x1]
      %v342 = vlaneseq
      %v343 = vshrl.u32 %v342, 7
      %v344 = vsub.s32 0, %v343
      %v345 = vrot.slane %v340, %v344
      %347 = vmatprep.subr.mxu0 0.0
      %348 = vmatpush1.msra.mxu0 %v308
      %349 = vmatprep.subr.mxu0 0.0
      %350 = vmatpush1.msra.mxu0 %v309
      %351 = vmatprep.subr.mxu0 0.0
      %352 = vmatpush1.msra.mxu0 %v310
      %353 = vmatprep.subr.mxu0 0.0
      %354 = vmatpush1.msra.mxu0 %v311
      %355 = vmatprep.subr.mxu0 0.0
      %356 = vmatpush1.msra.mxu0 %v312
      %357 = vmatprep.subr.mxu0 0.0
      %358 = vmatpush1.msra.mxu0 %v313
      %359 = vmatprep.subr.mxu0 0.0
      %360 = vmatpush1.msra.mxu0 %v314
      %361 = vmatprep.subr.mxu0 0.0
      %362 = vmatpush1.msra.mxu0 %v315
      %363 = vmatprep.subr.mxu0 0.0
      %364 = vmatpush1.msra.mxu0 %v316
      %365 = vmatprep.subr.mxu0 0.0
      %366 = vmatpush1.msra.mxu0 %v317
      %367 = vmatprep.subr.mxu0 0.0
      %368 = vmatpush1.msra.mxu0 %v318
      %369 = vmatprep.subr.mxu0 0.0
      %370 = vmatpush1.msra.mxu0 %v319
      %371 = vmatprep.subr.mxu0 0.0
      %372 = vmatpush1.msra.mxu0 %v320
      %373 = vmatprep.subr.mxu0 0.0
      %374 = vmatpush1.msra.mxu0 %v321
      %375 = vmatprep.subr.mxu0 0.0
      %376 = vmatpush1.msra.mxu0 %v322
      %377 = vmatprep.subr.mxu0 0.0
      %378 = vmatpush1.msra.mxu0 %v323
      %379 = vmatprep.subr.mxu0 0.0
      %380 = vmatpush1.msra.mxu0 %v324
      %381 = vmatprep.subr.mxu0 0.0
      %382 = vmatpush1.msra.mxu0 %v325
      %383 = vmatprep.subr.mxu0 0.0
      %384 = vmatpush1.msra.mxu0 %v326
      %385 = vmatprep.subr.mxu0 0.0
      %386 = vmatpush1.msra.mxu0 %v327
      %387 = vmatprep.subr.mxu0 0.0
      %388 = vmatpush1.msra.mxu0 %v328
      %389 = vmatprep.subr.mxu0 0.0
      %390 = vmatpush1.msra.mxu0 %v329
      %391 = vmatprep.subr.mxu0 0.0
      %392 = vmatpush1.msra.mxu0 %v330
      %393 = vmatprep.subr.mxu0 0.0
      %394 = vmatpush1.msra.mxu0 %v331
      %395 = vmatprep.subr.mxu0 0.0
      %396 = vmatpush1.msra.mxu0 %v332
      %397 = vmatprep.subr.mxu0 0.0
      %398 = vmatpush1.msra.mxu0 %v333
      %399 = vmatprep.subr.mxu0 0.0
      %400 = vmatpush1.msra.mxu0 %v334
      %401 = vmatprep.subr.mxu0 0.0
      %402 = vmatpush1.msra.mxu0 %v335
      %403 = vmatprep.subr.mxu0 0.0
      %404 = vmatpush1.msra.mxu0 %v336
      %405 = vmatprep.subr.mxu0 0.0
      %406 = vmatpush1.msra.mxu0 %v337
      %407 = vmatprep.subr.mxu0 0.0
      %408 = vmatpush1.msra.mxu0 %v338
      %409 = vmatprep.subr.mxu0 0.0
      %410 = vmatpush1.msra.mxu0 %v339
      %411 = vmatprep.mubr.f32.mxu0 %v307
      %412 = vmatmul.mubr.f32.gmra.mrb[0].mxu0 %v306
      %v413 = vpop.f32.mrb[0].mxu0
      %v414 = vadd.f32 %v345, %v413
      %v415 = vpop.f32.mrb[0].mxu0
      %416 = vdwg.mxu0
      %417 = vst [vmem:[#allocation12] sm:$0x3] %v414
    $region41: #{tpu_custom_call.1} parent=1 // pred_fallthru
      _
    // Predicated region
    $region42: #{tpu_custom_call.1} parent=1 // pred_check
      _
    $region43: #{tpu_custom_call.1} parent=1 // pred_check_branch
      %419 = sbr.rel (0) target = $region45
    $region44: #{tpu_custom_call.1} parent=1 // pred_region
      %s421 = ssub.s32 32, 32
      %422 = vsyncadd [#allocation5], %s421
      %s424 = sshll.u32 [#allocation9], 4
      %s425 = int_to_ptr.vmem [resolvable:$true] %s424
      %427 = dma.vmem_to_hbm [thread:$0]  %s425, 32, %s5, [#allocation5]
    $region45: #{tpu_custom_call.1} parent=1 // pred_fallthru
      _
    // Predicated region
    $region46: #{tpu_custom_call.1} parent=1 // pred_check
      _
    $region47: #{tpu_custom_call.1} parent=1 // pred_check_branch
      %429 = sbr.rel (0) target = $region49
    $region48: #{tpu_custom_call.1} parent=1 // pred_region
      %s431 = ssub.s32 32, 32
      %432 = vsyncadd [#allocation11], %s431
      %s434 = sshll.u32 [#allocation10], 4
      %s435 = int_to_ptr.vmem [resolvable:$true] %s434
      %437 = dma.vmem_to_hbm [thread:$0]  %s435, 32, %s6, [#allocation11]
    $region49: #{tpu_custom_call.1} parent=1 // pred_fallthru
      _
    // Predicated region
    $region50: #{tpu_custom_call.1} parent=1 // pred_check
      _
    $region51: #{tpu_custom_call.1} parent=1 // pred_check_branch
      %439 = sbr.rel (0) target = $region53
    $region52: #{tpu_custom_call.1} parent=1 // pred_region
      %s441 = ssub.s32 32, 32
      %442 = vsyncadd [#allocation11], %s441
      %s444 = sshll.u32 [#allocation12], 4
      %s445 = int_to_ptr.vmem [resolvable:$true] %s444
      %447 = dma.vmem_to_hbm [thread:$0]  %s445, 32, %s7, [#allocation11]
    $region53: #{tpu_custom_call.1} parent=1 // pred_fallthru
      _
    // Predicated region
    $region54: #{tpu_custom_call.1} parent=1 // pred_check
      _
    $region55: #{tpu_custom_call.1} parent=1 // pred_check_branch
      %449 = sbr.rel (0) target = $region57
    $region56: #{tpu_custom_call.1} parent=1 // pred_region
      %450 = dma.done [#allocation5], 32
    $region57: #{tpu_custom_call.1} parent=1 // pred_fallthru
      _
    // Predicated region
    $region58: #{tpu_custom_call.1} parent=1 // pred_check
      _
    $region59: #{tpu_custom_call.1} parent=1 // pred_check_branch
      %452 = sbr.rel (0) target = $region61
    $region60: #{tpu_custom_call.1} parent=1 // pred_region
      %453 = dma.done [#allocation11], 32
    $region61: #{tpu_custom_call.1} parent=1 // pred_fallthru
      _
    // Predicated region
    $region62: #{tpu_custom_call.1} parent=1 // pred_check
      _
    $region63: #{tpu_custom_call.1} parent=1 // pred_check_branch
      %455 = sbr.rel (0) target = $region65
    $region64: #{tpu_custom_call.1} parent=1 // pred_region
      %456 = dma.done [#allocation11], 32
    $region65: #{tpu_custom_call.1} parent=1 // pred_fallthru
      _
    %457 = vsyncpa [#allocation4], 1
    %458 = vsyncpa [#allocation7], 1
    %459 = vsyncpa [#allocation5], 1
    %460 = vsyncpa [#allocation11], 1

</llo_original>
